<compile_context>
chip_gen: v6e
topology: v6e:2x2x1
jax: 0.10.0
libtpu: 0.0.40
codegen_flags: <defaults>
</compile_context>

<pallas_src>
import jax
import jax.numpy as jnp
from jax.experimental import pallas as pl
from jax.experimental.pallas import tpu as pltpu


def _assoc_matrix_kernel(xs_ref, xt_ref, psts_ref, pt_ref):
    xs = xs_ref[...]                      # (Ns, D)
    xt = xt_ref[...]                      # (Nt, D)

    # W = xs @ xt.T  -> (Ns, Nt), accumulated in f32 on the MXU.
    w = jnp.einsum("id,jd->ij", xs, xt,
                   preferred_element_type=jnp.float32)

    # Row softmax (dim=1): Pst, shape (Ns, Nt).
    w_row_max = jnp.max(w, axis=1, keepdims=True)
    e_row = jnp.exp(w - w_row_max)
    pst = e_row / jnp.sum(e_row, axis=1, keepdims=True)

    # Column softmax of W == softmax(W.T, dim=1) kept un-transposed:
    # A = softmax(W, axis=0), shape (Ns, Nt);  Pts = A.T (never materialized).
    w_col_max = jnp.max(w, axis=0, keepdims=True)
    e_col = jnp.exp(w - w_col_max)
    a = e_col / jnp.sum(e_col, axis=0, keepdims=True)

    # Psts = Pst @ Pts = Pst @ A.T  -> contract the shared last (lane) dim.
    psts = jnp.einsum("ik,jk->ij", pst, a,
                      preferred_element_type=jnp.float32)
    psts_ref[...] = psts.astype(psts_ref.dtype)

    # Pt = mean(Pst, dim=0, keepdim=True) -> (1, Nt).
    pt = jnp.sum(pst, axis=0, keepdims=True) * (1.0 / pst.shape[0])
    pt_ref[...] = pt.astype(pt_ref.dtype)


def association_matrix(xs, xt):
    """Pallas implementation of AssociationMatrix()(xs, xt) -> (Psts, Pt)."""
    ns, nt = xs.shape[0], xt.shape[0]
    xs2 = xs.reshape(ns, -1)
    xt2 = xt.reshape(nt, -1)
    d = xs2.shape[1]
    assert xt2.shape[1] == d, "xs and xt must flatten to the same feature dim"

    # Zero-pad the contraction dim to a multiple of 128 (lane-dense MXU feed;
    # zeros do not change xs @ xt.T).
    dp = ((d + 127) // 128) * 128
    if dp != d:
        xs2 = jnp.pad(xs2, ((0, 0), (0, dp - d)))
        xt2 = jnp.pad(xt2, ((0, 0), (0, dp - d)))

    cost = pl.CostEstimate(
        flops=2 * ns * nt * dp + 2 * ns * ns * nt + 10 * ns * nt,
        transcendentals=2 * ns * nt,
        bytes_accessed=(ns * dp + nt * dp) * xs2.dtype.itemsize
        + (ns * ns + nt) * 4,
    )

    psts, pt = pl.pallas_call(
        _assoc_matrix_kernel,
        out_shape=(
            jax.ShapeDtypeStruct((ns, ns), jnp.float32),
            jax.ShapeDtypeStruct((1, nt), jnp.float32),
        ),
        in_specs=[
            pl.BlockSpec(memory_space=pltpu.MemorySpace.VMEM),
            pl.BlockSpec(memory_space=pltpu.MemorySpace.VMEM),
        ],
        out_specs=(
            pl.BlockSpec(memory_space=pltpu.MemorySpace.VMEM),
            pl.BlockSpec(memory_space=pltpu.MemorySpace.VMEM),
        ),
        cost_estimate=cost,
    )(xs2, xt2)
    return psts, pt


def _reference(xs, xt):
    # Pure-JAX reference mirroring the PyTorch module.
    ns, nt = xs.shape[0], xt.shape[0]
    xs2 = xs.reshape(ns, -1).astype(jnp.float32)
    xt2 = xt.reshape(nt, -1).astype(jnp.float32)
    w = xs2 @ xt2.T
    pst = jax.nn.softmax(w, axis=1)
    pts = jax.nn.softmax(w.T, axis=1)
    psts = pst @ pts
    pt = jnp.mean(pst, axis=0, keepdims=True)
    return psts, pt


if __name__ == "__main__":
    key = jax.random.PRNGKey(0)
    k1, k2 = jax.random.split(key)
    # xs: (Ns, K, H, W), xt: (Nt, K, H, W) -> flattened feature dim 4*16*16=1024
    xs = jax.random.normal(k1, (8, 4, 16, 16), dtype=jnp.float32)
    xt = jax.random.normal(k2, (16, 4, 16, 16), dtype=jnp.float32)

    psts, pt = association_matrix(xs, xt)
    jax.block_until_ready((psts, pt))

    ref_psts, ref_pt = _reference(xs, xt)
    assert psts.shape == (8, 8) and pt.shape == (1, 16)
    assert jnp.allclose(psts, ref_psts, rtol=1e-4, atol=1e-5), (psts, ref_psts)
    assert jnp.allclose(pt, ref_pt, rtol=1e-4, atol=1e-5), (pt, ref_pt)

    print("KERNEL_OK")
</pallas_src>

<mosaic_0001>
module attributes {stable_mosaic.version = 11 : i64} {
  func.func @_assoc_matrix_kernel(%arg0: memref<8x1024xf32, #tpu.memory_space<vmem>>, %arg1: memref<16x1024xf32, #tpu.memory_space<vmem>>, %arg2: memref<8x8xf32, #tpu.memory_space<vmem>>, %arg3: memref<1x16xf32, #tpu.memory_space<vmem>>) attributes {dimension_semantics = [], scalar_prefetch = 0 : i64, scratch_operands = 0 : i64, tpu.core_type = #tpu.core_type<tc>} {
    %c0 = arith.constant 0 : index
    %c0_0 = arith.constant 0 : index
    %0 = vector.load %arg0[%c0, %c0_0] : memref<8x1024xf32, #tpu.memory_space<vmem>>, vector<8x1024xf32>
    %c0_1 = arith.constant 0 : index
    %c0_2 = arith.constant 0 : index
    %1 = vector.load %arg1[%c0_1, %c0_2] : memref<16x1024xf32, #tpu.memory_space<vmem>>, vector<16x1024xf32>
    "tpu.trace_start"() <{level = 10 : i32, message = "id,jd->ij"}> : () -> ()
    %cst = arith.constant dense<0.000000e+00> : vector<8x16xf32>
    %2 = tpu.matmul %0, %1, %cst {dimension_numbers = #tpu.dot_dimension_numbers<[1], [1], [0], [0], [0, 0, 1, 0], [], []>} : vector<8x1024xf32>, vector<16x1024xf32>, vector<8x16xf32> -> vector<8x16xf32>
    "tpu.trace_stop"() : () -> ()
    %cst_3 = arith.constant dense<0xFF800000> : vector<8xf32>
    %3 = vector.multi_reduction <maximumf>, %2, %cst_3 [1] : vector<8x16xf32> to vector<8xf32>
    %4 = vector.shape_cast %3 : vector<8xf32> to vector<8x1xf32>
    %5 = vector.broadcast %4 : vector<8x1xf32> to vector<8x16xf32>
    %6 = arith.subf %2, %5 : vector<8x16xf32>
    %7 = math.exp %6 : vector<8x16xf32>
    %cst_4 = arith.constant dense<0.000000e+00> : vector<8xf32>
    %8 = vector.multi_reduction <add>, %7, %cst_4 [1] : vector<8x16xf32> to vector<8xf32>
    %9 = vector.shape_cast %8 : vector<8xf32> to vector<8x1xf32>
    %10 = vector.broadcast %9 : vector<8x1xf32> to vector<8x16xf32>
    %11 = arith.divf %7, %10 : vector<8x16xf32>
    %cst_5 = arith.constant dense<0xFF800000> : vector<16xf32>
    %12 = vector.multi_reduction <maximumf>, %2, %cst_5 [0] : vector<8x16xf32> to vector<16xf32>
    %13 = vector.shape_cast %12 : vector<16xf32> to vector<1x16xf32>
    %14 = vector.broadcast %13 : vector<1x16xf32> to vector<8x16xf32>
    %15 = arith.subf %2, %14 : vector<8x16xf32>
    %16 = math.exp %15 : vector<8x16xf32>
    %cst_6 = arith.constant dense<0.000000e+00> : vector<16xf32>
    %17 = vector.multi_reduction <add>, %16, %cst_6 [0] : vector<8x16xf32> to vector<16xf32>
    %18 = vector.shape_cast %17 : vector<16xf32> to vector<1x16xf32>
    %19 = vector.broadcast %18 : vector<1x16xf32> to vector<8x16xf32>
    %20 = arith.divf %16, %19 : vector<8x16xf32>
    "tpu.trace_start"() <{level = 10 : i32, message = "ik,jk->ij"}> : () -> ()
    %cst_7 = arith.constant dense<0.000000e+00> : vector<8x8xf32>
    %21 = tpu.matmul %11, %20, %cst_7 {dimension_numbers = #tpu.dot_dimension_numbers<[1], [1], [0], [0], [0, 0, 1, 0], [], []>} : vector<8x16xf32>, vector<8x16xf32>, vector<8x8xf32> -> vector<8x8xf32>
    "tpu.trace_stop"() : () -> ()
    %c0_8 = arith.constant 0 : index
    %c0_9 = arith.constant 0 : index
    %22 = vector.load %arg2[%c0_8, %c0_9] : memref<8x8xf32, #tpu.memory_space<vmem>>, vector<8x8xf32>
    tpu.vector_store %arg2[%c0_8, %c0_9], %21 {strides = array<i32>} : memref<8x8xf32, #tpu.memory_space<vmem>>, vector<8x8xf32>,
    %cst_10 = arith.constant dense<0.000000e+00> : vector<16xf32>
    %23 = vector.multi_reduction <add>, %11, %cst_10 [0] : vector<8x16xf32> to vector<16xf32>
    %24 = vector.shape_cast %23 : vector<16xf32> to vector<1x16xf32>
    %cst_11 = arith.constant 1.250000e-01 : f32
    %25 = vector.broadcast %cst_11 : f32 to vector<1x16xf32>
    %26 = arith.mulf %24, %25 : vector<1x16xf32>
    %c0_12 = arith.constant 0 : index
    %c0_13 = arith.constant 0 : index
    %27 = vector.load %arg3[%c0_12, %c0_13] : memref<1x16xf32, #tpu.memory_space<vmem>>, vector<1x16xf32>
    tpu.vector_store %arg3[%c0_12, %c0_13], %26 {strides = array<i32>} : memref<1x16xf32, #tpu.memory_space<vmem>>, vector<1x16xf32>,
    return
  }
}

</mosaic_0001>

<llo_original>
// kernel: tpu_custom_call.1
$region0: #{tpu_custom_call.1}
  #allocation0 [shape = 'u32[]', space=smem, size = 0x4, offset = 0x4, fixed_abs, tag = 'smem constant byte address 0x4 - core index']
  #allocation1 [shape = 'u32[144,128]{1,0:T(1,128)}', space=vmem, size = 0x12000, scoped, tag = 'internal scratch']
  %s0 = inlined_call_operand.hbm [shape: f32[8,1024], index: 0, kind: input, shape index: {}]
  %s1 = inlined_call_operand.hbm [shape: f32[16,1024], index: 1, kind: input, shape index: {}]
  %s2 = inlined_call_operand.hbm [shape: f32[8,8], index: 2, kind: output, shape index: {0}]
  %s3 = inlined_call_operand.hbm [shape: f32[1,16], index: 3, kind: output, shape index: {1}]
  %4 = xla_tuple %s2, %s3
  %s5 = sld [smem:[#allocation0]]
  $region34: #{tpu_custom_call.1} parent=0
    _
  %s7 = ssub.s32 1, %s5
  %s8 = scalar_select 0, %s7, %s5
  $region1: #{tpu_custom_call.1} parent=0
    #allocation2 [shape = 'u8[32768]{0}', space=vmem, size = 0x8000, scoped, tag = 'input window, operand 0, single buffered']
    #allocation3 [shape = 's32[1]{0}', space=sflag, size = 0x4, scoped, tag = 'scoped memory for tpu_custom_call.1']
    #allocation4 [shape = 's32[1]{0}', space=sflag, size = 0x4, scoped, tag = 'scoped memory for tpu_custom_call.1']
    #allocation5 [shape = 'u8[65536]{0}', space=vmem, size = 0x10000, scoped, tag = 'input window, operand 1, single buffered']
    #allocation6 [shape = 's32[1]{0}', space=sflag, size = 0x4, scoped, tag = 'scoped memory for tpu_custom_call.1']
    #allocation7 [shape = 'u8[4096]{0}', space=vmem, size = 0x1000, scoped, tag = 'output window, operand 0, single buffered']
    #allocation8 [shape = 'u8[512]{0}', space=vmem, size = 0x400, scoped, tag = 'output window, operand 1, single buffered']
    #allocation9 [shape = 's32[1]{0}', space=sflag, size = 0x4, scoped, tag = 'scoped memory for tpu_custom_call.1']
    %9 = vsyncpa [#allocation3], 0
    %10 = vsyncpa [#allocation6], 0
    %11 = vsyncpa [#allocation4], 0
    %12 = vsyncpa [#allocation9], 0
    // Predicated region
    $region2: #{tpu_custom_call.1} parent=1 // pred_check
      _
    $region3: #{tpu_custom_call.1} parent=1 // pred_check_branch
      %14 = sbr.rel (0) target = $region5
    $region4: #{tpu_custom_call.1} parent=1 // pred_region
      %s16 = ssub.s32 1024, 1024
      %17 = vsyncadd [#allocation3], %s16
      %s19 = sshll.u32 [#allocation2], 4
      %s20 = int_to_ptr.vmem [resolvable:$true] %s19
      %22 = dma.hbm_to_vmem [thread:$0]  %s0, 1024, %s20, [#allocation3]
    $region5: #{tpu_custom_call.1} parent=1 // pred_fallthru
      _
    // Predicated region
    $region6: #{tpu_custom_call.1} parent=1 // pred_check
      _
    $region7: #{tpu_custom_call.1} parent=1 // pred_check_branch
      %24 = sbr.rel (0) target = $region9
    $region8: #{tpu_custom_call.1} parent=1 // pred_region
      %s26 = ssub.s32 2048, 2048
      %27 = vsyncadd [#allocation6], %s26
      %s28 = sshll.u32 [#allocation5], 4
      %s29 = int_to_ptr.vmem [resolvable:$true] %s28
      %34 = dma.hbm_to_vmem [thread:$0]  %s1, 2048, %s29, [#allocation6], 1024, 1024, 64
    $region9: #{tpu_custom_call.1} parent=1 // pred_fallthru
      _
    // Predicated region
    $region10: #{tpu_custom_call.1} parent=1 // pred_check
      _
    $region11: #{tpu_custom_call.1} parent=1 // pred_check_branch
      %36 = sbr.rel (0) target = $region13
    $region12: #{tpu_custom_call.1} parent=1 // pred_region
      %37 = dma.done [#allocation3], 1024
    $region13: #{tpu_custom_call.1} parent=1 // pred_fallthru
      _
    // Predicated region
    $region14: #{tpu_custom_call.1} parent=1 // pred_check
      _
    $region15: #{tpu_custom_call.1} parent=1 // pred_check_branch
      %39 = sbr.rel (0) target = $region17
    $region16: #{tpu_custom_call.1} parent=1 // pred_region
      %40 = dma.done [#allocation6], 2048
    $region17: #{tpu_custom_call.1} parent=1 // pred_fallthru
      _
    %v41 = vld [vmem:[#allocation2] sm:$0xff]
    %v42 = vld [vmem:[#allocation2 + $0x8] sm:$0xff]
    %v43 = vld [vmem:[#allocation2 + $0x10] sm:$0xff]
    %v44 = vld [vmem:[#allocation2 + $0x18] sm:$0xff]
    %v45 = vld [vmem:[#allocation2 + $0x20] sm:$0xff]
    %v46 = vld [vmem:[#allocation2 + $0x28] sm:$0xff]
    %v47 = vld [vmem:[#allocation2 + $0x30] sm:$0xff]
    %v48 = vld [vmem:[#allocation2 + $0x38] sm:$0xff]
    %v49 = vld [vmem:[#allocation5] sm:$0xff]
    %v50 = vld [vmem:[#allocation5 + $0x8] sm:$0xff]
    %v51 = vld [vmem:[#allocation5 + $0x10] sm:$0xff]
    %v52 = vld [vmem:[#allocation5 + $0x18] sm:$0xff]
    %v53 = vld [vmem:[#allocation5 + $0x20] sm:$0xff]
    %v54 = vld [vmem:[#allocation5 + $0x28] sm:$0xff]
    %v55 = vld [vmem:[#allocation5 + $0x30] sm:$0xff]
    %v56 = vld [vmem:[#allocation5 + $0x38] sm:$0xff]
    %v57 = vld [vmem:[#allocation5 + $0x40] sm:$0xff]
    %v58 = vld [vmem:[#allocation5 + $0x48] sm:$0xff]
    %v59 = vld [vmem:[#allocation5 + $0x50] sm:$0xff]
    %v60 = vld [vmem:[#allocation5 + $0x58] sm:$0xff]
    %v61 = vld [vmem:[#allocation5 + $0x60] sm:$0xff]
    %v62 = vld [vmem:[#allocation5 + $0x68] sm:$0xff]
    %v63 = vld [vmem:[#allocation5 + $0x70] sm:$0xff]
    %v64 = vld [vmem:[#allocation5 + $0x78] sm:$0xff]
    %65 = vmatprep.subr.mxu0 0.0
    %66 = vmatpush1.xpose.msra.mxu0 0.0
    %67 = vmatprep.subr.mxu0 0.0
    %68 = vmatpush1.xpose.msra.mxu0 0.0
    %69 = vmatprep.subr.mxu0 0.0
    %70 = vmatpush1.xpose.msra.mxu0 0.0
    %71 = vmatprep.subr.mxu0 0.0
    %72 = vmatpush1.xpose.msra.mxu0 0.0
    %73 = vmatprep.subr.mxu0 0.0
    %74 = vmatpush1.xpose.msra.mxu0 0.0
    %75 = vmatprep.subr.mxu0 0.0
    %76 = vmatpush1.xpose.msra.mxu0 0.0
    %77 = vmatprep.subr.mxu0 0.0
    %78 = vmatpush1.xpose.msra.mxu0 0.0
    %79 = vmatprep.subr.mxu0 0.0
    %80 = vmatpush1.xpose.msra.mxu0 0.0
    %81 = vmatprep.subr.mxu0 0.0
    %82 = vmatpush1.xpose.msra.mxu0 0.0
    %83 = vmatprep.subr.mxu0 0.0
    %84 = vmatpush1.xpose.msra.mxu0 0.0
    %85 = vmatprep.subr.mxu0 0.0
    %86 = vmatpush1.xpose.msra.mxu0 0.0
    %87 = vmatprep.subr.mxu0 0.0
    %88 = vmatpush1.xpose.msra.mxu0 0.0
    %89 = vmatprep.subr.mxu0 0.0
    %90 = vmatpush1.xpose.msra.mxu0 0.0
    %91 = vmatprep.subr.mxu0 0.0
    %92 = vmatpush1.xpose.msra.mxu0 0.0
    %93 = vmatprep.subr.mxu0 %v58
    %94 = vmatpush1.xpose.msra.mxu0 %v57
    %95 = vmatprep.subr.mxu0 %v50
    %96 = vmatpush1.xpose.msra.mxu0 %v49
    %97 = vmatprep.subr.mxu0 0.0
    %98 = vmatpush2.xpose.msra.mxu0 0.0
    %99 = vmatprep.subr.mxu0 0.0
    %100 = vmatpush2.xpose.msra.mxu0 0.0
    %101 = vmatprep.subr.mxu0 0.0
    %102 = vmatpush2.xpose.msra.mxu0 0.0
    %103 = vmatprep.subr.mxu0 0.0
    %104 = vmatpush2.xpose.msra.mxu0 0.0
    %105 = vmatprep.subr.mxu0 0.0
    %106 = vmatpush2.xpose.msra.mxu0 0.0
    %107 = vmatprep.subr.mxu0 0.0
    %108 = vmatpush2.xpose.msra.mxu0 0.0
    %109 = vmatprep.subr.mxu0 0.0
    %110 = vmatpush2.xpose.msra.mxu0 0.0
    %111 = vmatprep.subr.mxu0 0.0
    %112 = vmatpush2.xpose.msra.mxu0 0.0
    %113 = vmatprep.subr.mxu0 0.0
    %114 = vmatpush2.xpose.msra.mxu0 0.0
    %115 = vmatprep.subr.mxu0 0.0
    %116 = vmatpush2.xpose.msra.mxu0 0.0
    %117 = vmatprep.subr.mxu0 0.0
    %118 = vmatpush2.xpose.msra.mxu0 0.0
    %119 = vmatprep.subr.mxu0 0.0
    %120 = vmatpush2.xpose.msra.mxu0 0.0
    %121 = vmatprep.subr.mxu0 0.0
    %122 = vmatpush2.xpose.msra.mxu0 0.0
    %123 = vmatprep.subr.mxu0 0.0
    %124 = vmatpush2.xpose.msra.mxu0 0.0
    %125 = vmatprep.subr.mxu0 0.0
    %126 = vmatpush2.xpose.msra.mxu0 0.0
    %127 = vmatprep.subr.mxu0 0.0
    %128 = vmatpush2.xpose.msra.mxu0 0.0
    %129 = vmatprep.mubr.f32.mxu0 %v42
    %130 = vmatmul.mubr.f32.gmra.mxu0 %v41
    %v131 = vpop.f32.mrf.mxu0
    %v132 = vadd.f32 0.0, %v131
    %v133 = vpop.f32.mrf.mxu0
    %134 = vdwg.mxu0
    %135 = vmatprep.subr.mxu0 0.0
    %136 = vmatpush1.xpose.msra.mxu0 0.0
    %137 = vmatprep.subr.mxu0 0.0
    %138 = vmatpush1.xpose.msra.mxu0 0.0
    %139 = vmatprep.subr.mxu0 0.0
    %140 = vmatpush1.xpose.msra.mxu0 0.0
    %141 = vmatprep.subr.mxu0 0.0
    %142 = vmatpush1.xpose.msra.mxu0 0.0
    %143 = vmatprep.subr.mxu0 0.0
    %144 = vmatpush1.xpose.msra.mxu0 0.0
    %145 = vmatprep.subr.mxu0 0.0
    %146 = vmatpush1.xpose.msra.mxu0 0.0
    %147 = vmatprep.subr.mxu0 0.0
    %148 = vmatpush1.xpose.msra.mxu0 0.0
    %149 = vmatprep.subr.mxu0 0.0
    %150 = vmatpush1.xpose.msra.mxu0 0.0
    %151 = vmatprep.subr.mxu0 0.0
    %152 = vmatpush1.xpose.msra.mxu0 0.0
    %153 = vmatprep.subr.mxu0 0.0
    %154 = vmatpush1.xpose.msra.mxu0 0.0
    %155 = vmatprep.subr.mxu0 0.0
    %156 = vmatpush1.xpose.msra.mxu0 0.0
    %157 = vmatprep.subr.mxu0 0.0
    %158 = vmatpush1.xpose.msra.mxu0 0.0
    %159 = vmatprep.subr.mxu0 0.0
    %160 = vmatpush1.xpose.msra.mxu0 0.0
    %161 = vmatprep.subr.mxu0 0.0
    %162 = vmatpush1.xpose.msra.mxu0 0.0
    %163 = vmatprep.subr.mxu0 %v60
    %164 = vmatpush1.xpose.msra.mxu0 %v59
    %165 = vmatprep.subr.mxu0 %v52
    %166 = vmatpush1.xpose.msra.mxu0 %v51
    %167 = vmatprep.subr.mxu0 0.0
    %168 = vmatpush2.xpose.msra.mxu0 0.0
    %169 = vmatprep.subr.mxu0 0.0
    %170 = vmatpush2.xpose.msra.mxu0 0.0
    %171 = vmatprep.subr.mxu0 0.0
    %172 = vmatpush2.xpose.msra.mxu0 0.0
    %173 = vmatprep.subr.mxu0 0.0
    %174 = vmatpush2.xpose.msra.mxu0 0.0
    %175 = vmatprep.subr.mxu0 0.0
    %176 = vmatpush2.xpose.msra.mxu0 0.0
    %177 = vmatprep.subr.mxu0 0.0
    %178 = vmatpush2.xpose.msra.mxu0 0.0
    %179 = vmatprep.subr.mxu0 0.0
    %180 = vmatpush2.xpose.msra.mxu0 0.0
    %181 = vmatprep.subr.mxu0 0.0
    %182 = vmatpush2.xpose.msra.mxu0 0.0
    %183 = vmatprep.subr.mxu0 0.0
    %184 = vmatpush2.xpose.msra.mxu0 0.0
    %185 = vmatprep.subr.mxu0 0.0
    %186 = vmatpush2.xpose.msra.mxu0 0.0
    %187 = vmatprep.subr.mxu0 0.0
    %188 = vmatpush2.xpose.msra.mxu0 0.0
    %189 = vmatprep.subr.mxu0 0.0
    %190 = vmatpush2.xpose.msra.mxu0 0.0
    %191 = vmatprep.subr.mxu0 0.0
    %192 = vmatpush2.xpose.msra.mxu0 0.0
    %193 = vmatprep.subr.mxu0 0.0
    %194 = vmatpush2.xpose.msra.mxu0 0.0
    %195 = vmatprep.subr.mxu0 0.0
    %196 = vmatpush2.xpose.msra.mxu0 0.0
    %197 = vmatprep.subr.mxu0 0.0
    %198 = vmatpush2.xpose.msra.mxu0 0.0
    %199 = vmatprep.mubr.f32.mxu0 %v44
    %200 = vmatmul.mubr.f32.gmra.mxu0 %v43
    %v201 = vpop.f32.mrf.mxu0
    %v202 = vadd.f32 %v132, %v201
    %v203 = vpop.f32.mrf.mxu0
    %204 = vdwg.mxu0
    %205 = vmatprep.subr.mxu0 0.0
    %206 = vmatpush1.xpose.msra.mxu0 0.0
    %207 = vmatprep.subr.mxu0 0.0
    %208 = vmatpush1.xpose.msra.mxu0 0.0
    %209 = vmatprep.subr.mxu0 0.0
    %210 = vmatpush1.xpose.msra.mxu0 0.0
    %211 = vmatprep.subr.mxu0 0.0
    %212 = vmatpush1.xpose.msra.mxu0 0.0
    %213 = vmatprep.subr.mxu0 0.0
    %214 = vmatpush1.xpose.msra.mxu0 0.0
    %215 = vmatprep.subr.mxu0 0.0
    %216 = vmatpush1.xpose.msra.mxu0 0.0
    %217 = vmatprep.subr.mxu0 0.0
    %218 = vmatpush1.xpose.msra.mxu0 0.0
    %219 = vmatprep.subr.mxu0 0.0
    %220 = vmatpush1.xpose.msra.mxu0 0.0
    %221 = vmatprep.subr.mxu0 0.0
    %222 = vmatpush1.xpose.msra.mxu0 0.0
    %223 = vmatprep.subr.mxu0 0.0
    %224 = vmatpush1.xpose.msra.mxu0 0.0
    %225 = vmatprep.subr.mxu0 0.0
    %226 = vmatpush1.xpose.msra.mxu0 0.0
    %227 = vmatprep.subr.mxu0 0.0
    %228 = vmatpush1.xpose.msra.mxu0 0.0
    %229 = vmatprep.subr.mxu0 0.0
    %230 = vmatpush1.xpose.msra.mxu0 0.0
    %231 = vmatprep.subr.mxu0 0.0
    %232 = vmatpush1.xpose.msra.mxu0 0.0
    %233 = vmatprep.subr.mxu0 %v62
    %234 = vmatpush1.xpose.msra.mxu0 %v61
    %235 = vmatprep.subr.mxu0 %v54
    %236 = vmatpush1.xpose.msra.mxu0 %v53
    %237 = vmatprep.subr.mxu0 0.0
    %238 = vmatpush2.xpose.msra.mxu0 0.0
    %239 = vmatprep.subr.mxu0 0.0
    %240 = vmatpush2.xpose.msra.mxu0 0.0
    %241 = vmatprep.subr.mxu0 0.0
    %242 = vmatpush2.xpose.msra.mxu0 0.0
    %243 = vmatprep.subr.mxu0 0.0
    %244 = vmatpush2.xpose.msra.mxu0 0.0
    %245 = vmatprep.subr.mxu0 0.0
    %246 = vmatpush2.xpose.msra.mxu0 0.0
    %247 = vmatprep.subr.mxu0 0.0
    %248 = vmatpush2.xpose.msra.mxu0 0.0
    %249 = vmatprep.subr.mxu0 0.0
    %250 = vmatpush2.xpose.msra.mxu0 0.0
    %251 = vmatprep.subr.mxu0 0.0
    %252 = vmatpush2.xpose.msra.mxu0 0.0
    %253 = vmatprep.subr.mxu0 0.0
    %254 = vmatpush2.xpose.msra.mxu0 0.0
    %255 = vmatprep.subr.mxu0 0.0
    %256 = vmatpush2.xpose.msra.mxu0 0.0
    %257 = vmatprep.subr.mxu0 0.0
    %258 = vmatpush2.xpose.msra.mxu0 0.0
    %259 = vmatprep.subr.mxu0 0.0
    %260 = vmatpush2.xpose.msra.mxu0 0.0
    %261 = vmatprep.subr.mxu0 0.0
    %262 = vmatpush2.xpose.msra.mxu0 0.0
    %263 = vmatprep.subr.mxu0 0.0
    %264 = vmatpush2.xpose.msra.mxu0 0.0
    %265 = vmatprep.subr.mxu0 0.0
    %266 = vmatpush2.xpose.msra.mxu0 0.0
    %267 = vmatprep.subr.mxu0 0.0
    %268 = vmatpush2.xpose.msra.mxu0 0.0
    %269 = vmatprep.mubr.f32.mxu0 %v46
    %270 = vmatmul.mubr.f32.gmra.mxu0 %v45
    %v271 = vpop.f32.mrf.mxu0
    %v272 = vadd.f32 %v202, %v271
    %v273 = vpop.f32.mrf.mxu0
    %274 = vdwg.mxu0
    %275 = vmatprep.subr.mxu0 0.0
    %276 = vmatpush1.xpose.msra.mxu0 0.0
    %277 = vmatprep.subr.mxu0 0.0
    %278 = vmatpush1.xpose.msra.mxu0 0.0
    %279 = vmatprep.subr.mxu0 0.0
    %280 = vmatpush1.xpose.msra.mxu0 0.0
    %281 = vmatprep.subr.mxu0 0.0
    %282 = vmatpush1.xpose.msra.mxu0 0.0
    %283 = vmatprep.subr.mxu0 0.0
    %284 = vmatpush1.xpose.msra.mxu0 0.0
    %285 = vmatprep.subr.mxu0 0.0
    %286 = vmatpush1.xpose.msra.mxu0 0.0
    %287 = vmatprep.subr.mxu0 0.0
    %288 = vmatpush1.xpose.msra.mxu0 0.0
    %289 = vmatprep.subr.mxu0 0.0
    %290 = vmatpush1.xpose.msra.mxu0 0.0
    %291 = vmatprep.subr.mxu0 0.0
    %292 = vmatpush1.xpose.msra.mxu0 0.0
    %293 = vmatprep.subr.mxu0 0.0
    %294 = vmatpush1.xpose.msra.mxu0 0.0
    %295 = vmatprep.subr.mxu0 0.0
    %296 = vmatpush1.xpose.msra.mxu0 0.0
    %297 = vmatprep.subr.mxu0 0.0
    %298 = vmatpush1.xpose.msra.mxu0 0.0
    %299 = vmatprep.subr.mxu0 0.0
    %300 = vmatpush1.xpose.msra.mxu0 0.0
    %301 = vmatprep.subr.mxu0 0.0
    %302 = vmatpush1.xpose.msra.mxu0 0.0
    %303 = vmatprep.subr.mxu0 %v64
    %304 = vmatpush1.xpose.msra.mxu0 %v63
    %305 = vmatprep.subr.mxu0 %v56
    %306 = vmatpush1.xpose.msra.mxu0 %v55
    %307 = vmatprep.subr.mxu0 0.0
    %308 = vmatpush2.xpose.msra.mxu0 0.0
    %309 = vmatprep.subr.mxu0 0.0
    %310 = vmatpush2.xpose.msra.mxu0 0.0
    %311 = vmatprep.subr.mxu0 0.0
    %312 = vmatpush2.xpose.msra.mxu0 0.0
    %313 = vmatprep.subr.mxu0 0.0
    %314 = vmatpush2.xpose.msra.mxu0 0.0
    %315 = vmatprep.subr.mxu0 0.0
    %316 = vmatpush2.xpose.msra.mxu0 0.0
    %317 = vmatprep.subr.mxu0 0.0
    %318 = vmatpush2.xpose.msra.mxu0 0.0
    %319 = vmatprep.subr.mxu0 0.0
    %320 = vmatpush2.xpose.msra.mxu0 0.0
    %321 = vmatprep.subr.mxu0 0.0
    %322 = vmatpush2.xpose.msra.mxu0 0.0
    %323 = vmatprep.subr.mxu0 0.0
    %324 = vmatpush2.xpose.msra.mxu0 0.0
    %325 = vmatprep.subr.mxu0 0.0
    %326 = vmatpush2.xpose.msra.mxu0 0.0
    %327 = vmatprep.subr.mxu0 0.0
    %328 = vmatpush2.xpose.msra.mxu0 0.0
    %329 = vmatprep.subr.mxu0 0.0
    %330 = vmatpush2.xpose.msra.mxu0 0.0
    %331 = vmatprep.subr.mxu0 0.0
    %332 = vmatpush2.xpose.msra.mxu0 0.0
    %333 = vmatprep.subr.mxu0 0.0
    %334 = vmatpush2.xpose.msra.mxu0 0.0
    %335 = vmatprep.subr.mxu0 0.0
    %336 = vmatpush2.xpose.msra.mxu0 0.0
    %337 = vmatprep.subr.mxu0 0.0
    %338 = vmatpush2.xpose.msra.mxu0 0.0
    %339 = vmatprep.mubr.f32.mxu0 %v48
    %340 = vmatmul.mubr.f32.gmra.mxu0 %v47
    %v341 = vpop.f32.mrf.mxu0
    %v342 = vadd.f32 %v272, %v341
    %v343 = vpop.f32.mrf.mxu0
    %344 = vdwg.mxu0
    %vm345 = vcmask 130048
    %v346 = vsel %vm345, %v342, -inf
    %347 = vmax.xlane.f32.xlu0 %v346
    %v348 = vpop.xlane.xlu0 %347
    %v349 = vsub.f32 %v342, %v348
    %v350 = vmul.f32 %v349, 1.442695
    %v351 = vpow.pop %v350
    %v352 = vsel %vm345, %v351, 0.0
    %353 = vadd.xlane.f32.xlu0 %v352
    %v354 = vpop.xlane.xlu0 %353
    %v355 = vrcp.pop %v354
    %v356 = vmul.f32 %v351, %v355
    %v357 = vrot.slane %v346, 4
    %v358 = vmax.f32 %v346, %v357
    %v359 = vrot.slane %v358, 2
    %v360 = vmax.f32 %v358, %v359
    %v361 = vrot.slane %v360, 1
    %v362 = vmax.f32 %v360, %v361
    %v363 = vsub.f32 %v342, %v362
    %v364 = vmul.f32 %v363, 1.442695
    %v365 = vpow.pop %v364
    %v366 = vsel %vm345, %v365, 0.0
    %v367 = vrot.slane %v366, 4
    %v368 = vadd.f32 %v366, %v367
    %v369 = vrot.slane %v368, 2
    %v370 = vadd.f32 %v368, %v369
    %v371 = vrot.slane %v370, 1
    %v372 = vadd.f32 %v370, %v371
    %v373 = vrcp.pop %v372
    %v374 = vmul.f32 %v365, %v373
    %v376 = vsel %vm345, %v356, 0
    %v379 = vsel %vm345, %v374, 0
    %381 = vmatprep.subr.mxu0 0.0
    %382 = vmatpush1.xpose.msra.mxu0 0.0
    %383 = vmatprep.subr.mxu0 0.0
    %384 = vmatpush1.xpose.msra.mxu0 0.0
    %385 = vmatprep.subr.mxu0 0.0
    %386 = vmatpush1.xpose.msra.mxu0 0.0
    %387 = vmatprep.subr.mxu0 0.0
    %388 = vmatpush1.xpose.msra.mxu0 0.0
    %389 = vmatprep.subr.mxu0 0.0
    %390 = vmatpush1.xpose.msra.mxu0 0.0
    %391 = vmatprep.subr.mxu0 0.0
    %392 = vmatpush1.xpose.msra.mxu0 0.0
    %393 = vmatprep.subr.mxu0 0.0
    %394 = vmatpush1.xpose.msra.mxu0 0.0
    %395 = vmatprep.subr.mxu0 0.0
    %396 = vmatpush1.xpose.msra.mxu0 0.0
    %397 = vmatprep.subr.mxu0 0.0
    %398 = vmatpush1.xpose.msra.mxu0 0.0
    %399 = vmatprep.subr.mxu0 0.0
    %400 = vmatpush1.xpose.msra.mxu0 0.0
    %401 = vmatprep.subr.mxu0 0.0
    %402 = vmatpush1.xpose.msra.mxu0 0.0
    %403 = vmatprep.subr.mxu0 0.0
    %404 = vmatpush1.xpose.msra.mxu0 0.0
    %405 = vmatprep.subr.mxu0 0.0
    %406 = vmatpush1.xpose.msra.mxu0 0.0
    %407 = vmatprep.subr.mxu0 0.0
    %408 = vmatpush1.xpose.msra.mxu0 0.0
    %409 = vmatprep.subr.mxu0 0.0
    %410 = vmatpush1.xpose.msra.mxu0 0.0
    %411 = vmatprep.subr.mxu0 0.0
    %412 = vmatpush1.xpose.msra.mxu0 %v379
    %413 = vmatprep.subr.mxu0 0.0
    %414 = vmatpush2.xpose.msra.mxu0 0.0
    %415 = vmatprep.subr.mxu0 0.0
    %416 = vmatpush2.xpose.msra.mxu0 0.0
    %417 = vmatprep.subr.mxu0 0.0
    %418 = vmatpush2.xpose.msra.mxu0 0.0
    %419 = vmatprep.subr.mxu0 0.0
    %420 = vmatpush2.xpose.msra.mxu0 0.0
    %421 = vmatprep.subr.mxu0 0.0
    %422 = vmatpush2.xpose.msra.mxu0 0.0
    %423 = vmatprep.subr.mxu0 0.0
    %424 = vmatpush2.xpose.msra.mxu0 0.0
    %425 = vmatprep.subr.mxu0 0.0
    %426 = vmatpush2.xpose.msra.mxu0 0.0
    %427 = vmatprep.subr.mxu0 0.0
    %428 = vmatpush2.xpose.msra.mxu0 0.0
    %429 = vmatprep.subr.mxu0 0.0
    %430 = vmatpush2.xpose.msra.mxu0 0.0
    %431 = vmatprep.subr.mxu0 0.0
    %432 = vmatpush2.xpose.msra.mxu0 0.0
    %433 = vmatprep.subr.mxu0 0.0
    %434 = vmatpush2.xpose.msra.mxu0 0.0
    %435 = vmatprep.subr.mxu0 0.0
    %436 = vmatpush2.xpose.msra.mxu0 0.0
    %437 = vmatprep.subr.mxu0 0.0
    %438 = vmatpush2.xpose.msra.mxu0 0.0
    %439 = vmatprep.subr.mxu0 0.0
    %440 = vmatpush2.xpose.msra.mxu0 0.0
    %441 = vmatprep.subr.mxu0 0.0
    %442 = vmatpush2.xpose.msra.mxu0 0.0
    %443 = vmatprep.subr.mxu0 0.0
    %444 = vmatpush2.xpose.msra.mxu0 0.0
    %445 = vmatprep.mubr.f32.mxu0 0.0
    %446 = vmatmul.mubr.f32.gmra.mxu0 %v376
    %v447 = vpop.f32.mrf.mxu0
    %v448 = vadd.f32 0.0, %v447
    %v449 = vpop.f32.mrf.mxu0
    %450 = vdwg.mxu0
    %vm451 = vcmask 64512
    %452 = vst.msk [vmem:[#allocation7] sm:$0xff] %vm451, %v448
    %v453 = vsel %vm345, %v356, 0.0
    %v454 = vrot.slane %v453, 4
    %v455 = vadd.f32 %v453, %v454
    %v456 = vrot.slane %v455, 2
    %v457 = vadd.f32 %v455, %v456
    %v458 = vrot.slane %v457, 1
    %v459 = vadd.f32 %v457, %v458
    %v460 = vmul.f32 %v459, 0.125
    %vm461 = vcmask 122880
    %462 = vst.msk [vmem:[#allocation8] sm:$0x1] %vm461, %v460
    // Predicated region
    $region18: #{tpu_custom_call.1} parent=1 // pred_check
      _
    $region19: #{tpu_custom_call.1} parent=1 // pred_check_branch
      %464 = sbr.rel (0) target = $region21
    $region20: #{tpu_custom_call.1} parent=1 // pred_region
      %s466 = ssub.s32 128, 128
      %467 = vsyncadd [#allocation4], %s466
      %s469 = sshll.u32 [#allocation7], 4
      %s470 = int_to_ptr.vmem [resolvable:$true] %s469
      %472 = dma.vmem_to_hbm [thread:$0]  %s470, 128, %s2, [#allocation4]
    $region21: #{tpu_custom_call.1} parent=1 // pred_fallthru
      _
    // Predicated region
    $region22: #{tpu_custom_call.1} parent=1 // pred_check
      _
    $region23: #{tpu_custom_call.1} parent=1 // pred_check_branch
      %474 = sbr.rel (0) target = $region25
    $region24: #{tpu_custom_call.1} parent=1 // pred_region
      %s476 = ssub.s32 16, 16
      %477 = vsyncadd [#allocation9], %s476
      %s479 = sshll.u32 [#allocation8], 4
      %s480 = int_to_ptr.vmem [resolvable:$true] %s479
      %482 = dma.vmem_to_hbm [thread:$0]  %s480, 16, %s3, [#allocation9]
    $region25: #{tpu_custom_call.1} parent=1 // pred_fallthru
      _
    // Predicated region
    $region26: #{tpu_custom_call.1} parent=1 // pred_check
      _
    $region27: #{tpu_custom_call.1} parent=1 // pred_check_branch
      %484 = sbr.rel (0) target = $region29
    $region28: #{tpu_custom_call.1} parent=1 // pred_region
      %485 = dma.done [#allocation4], 128
    $region29: #{tpu_custom_call.1} parent=1 // pred_fallthru
      _
    // Predicated region
    $region30: #{tpu_custom_call.1} parent=1 // pred_check
      _
    $region31: #{tpu_custom_call.1} parent=1 // pred_check_branch
      %487 = sbr.rel (0) target = $region33
    $region32: #{tpu_custom_call.1} parent=1 // pred_region
      %488 = dma.done [#allocation9], 16
    $region33: #{tpu_custom_call.1} parent=1 // pred_fallthru
      _
    %489 = vsyncpa [#allocation3], 1
    %490 = vsyncpa [#allocation6], 1
    %491 = vsyncpa [#allocation4], 1
    %492 = vsyncpa [#allocation9], 1

</llo_original>
